<compile_context>
chip_gen: v6e
topology: v6e:2x2x1
jax: 0.10.0
libtpu: 0.0.40
codegen_flags: <defaults>
</compile_context>

<pallas_src>
import jax
import jax.numpy as jnp
from jax.experimental import pallas as pl
from jax.experimental.pallas import tpu as pltpu


# --------------------------------------------------------------------------------------
# Helpers
# --------------------------------------------------------------------------------------
def _round_up(n, m=128):
    return ((n + m - 1) // m) * m


def _is_v7():
    try:
        kind = jax.devices()[0].device_kind.lower()
    except Exception:
        kind = ""
    return ("v7" in kind) or ("tpu7" in kind)


def _pick_batch_tile(b, is_v7):
    if b <= 8:
        return 8
    if is_v7:
        # >=2 grid steps so the 'parallel' batch axis engages both TensorCores.
        return min(256, _round_up(-(-b // 2), 8))
    # v5e / v6e: single TensorCore -> one big tile (up to 512 rows) amortizes step overhead.
    return min(512, _round_up(b, 8))


# --------------------------------------------------------------------------------------
# Kernel
# --------------------------------------------------------------------------------------
def xception_cbam_head_kernel(
    x_ref,        # (Bt, C)        bf16 backbone features (batch tile)
    ca_w1T_ref,   # (C, CRp)       bf16 channel-attn conv1 (1x1, no bias), transposed, lane-padded
    ca_w2T_ref,   # (CRp, C)       bf16 channel-attn conv2 (1x1, no bias), transposed, lane-padded
    w1_ref,       # (C, H1)        bf16 fc1 with BN1 + [x, x] concat folded in
    w2_ref,       # (H1, H2)       bf16 fc2 with BN2 folded in
    w3_ref,       # (H2, OUTp)     bf16 fc3 with BN3 folded in, output lane-padded to 128
    bias_ref,     # (3, PAD)       f32 VMEM: row0 fc1 bias, row1 fc2 bias, row2 fc3 bias
    sa_ref,       # (2,)           f32 SMEM: spatial-attn 7x7 center taps [w_avg, w_max]
    out_ref,      # (Bt, OUTp)     f32 logits (lane-padded)
):
    x = x_ref[...]                               # bf16
    wdt = ca_w1T_ref.dtype                       # bf16

    # ---------------- CBAM: channel attention ----------------
    # avg_pool(x) == max_pool(x) == x on a 1x1 map, so avg_out == max_out == mlp(x).
    h = jnp.maximum(
        jnp.dot(x, ca_w1T_ref[...], preferred_element_type=jnp.float32), 0.0)
    mlp = jnp.dot(h.astype(wdt), ca_w2T_ref[...], preferred_element_type=jnp.float32)
    x_ca = x.astype(jnp.float32) * jax.nn.sigmoid(mlp + mlp)   # sigmoid(avg_out + max_out)

    # ---------------- CBAM: spatial attention ----------------
    avg_c = jnp.mean(x_ca, axis=1, keepdims=True)       # (Bt, 1) mean over channels
    max_c = jnp.max(x_ca, axis=1, keepdims=True)        # (Bt, 1) max over channels
    sp_logit = avg_c * sa_ref[0] + max_c * sa_ref[1]     # SMEM scalars -> scalar path
    x_sa = x_ca * jax.nn.sigmoid(sp_logit)

    # ------- classifier (inference): BN1 + concat folded into fc1, BN2->fc2, BN3->fc3 -------
    b1 = bias_ref[0:1, : w1_ref.shape[1]]
    b2 = bias_ref[1:2, : w2_ref.shape[1]]
    b3 = bias_ref[2:3, : w3_ref.shape[1]]
    h1 = jnp.maximum(
        jnp.dot(x_sa.astype(wdt), w1_ref[...], preferred_element_type=jnp.float32) + b1, 0.0)
    h2 = jnp.maximum(
        jnp.dot(h1.astype(wdt), w2_ref[...], preferred_element_type=jnp.float32) + b2, 0.0)
    out_ref[...] = (
        jnp.dot(h2.astype(wdt), w3_ref[...], preferred_element_type=jnp.float32) + b3)


# --------------------------------------------------------------------------------------
# Parameters: raw (module-shaped, f32) and folded (kernel-shaped, bf16 weights)
# --------------------------------------------------------------------------------------
def init_raw_params(key, feature_dim=256, ratio=8, h1=128, h2=64, num_classes=3):
    """Deterministic synthetic parameters matching the module's __init__ shapes
    (scaled down: feature_dim 2048->256, fc dims 1024/512 -> 128/64)."""
    ks = jax.random.split(key, 12)
    c, cr, twoc = feature_dim, feature_dim // ratio, 2 * feature_dim

    def n(k, shape, scale):
        return scale * jax.random.normal(k, shape, dtype=jnp.float32)

    # ChannelAttention shared MLP: Conv2d(C, C/r, 1) -> ReLU -> Conv2d(C/r, C, 1), no bias.
    ca_w1 = n(ks[0], (cr, c), 0.05)          # PyTorch conv weight (out, in, 1, 1) squeezed
    ca_w2 = n(ks[1], (c, cr), 0.05)
    # SpatialAttention: Conv2d(2, 1, 7, padding=3, bias=False); only center taps matter on 1x1.
    sa_conv_w = n(ks[2], (1, 2, 7, 7), 0.1)
    sa_w = sa_conv_w[0, :, 3, 3]             # (2,) = [w for avg-channel, w for max-channel]

    def bn(k, dim):
        kg, kb, km, kv = jax.random.split(k, 4)
        gamma = 1.0 + 0.1 * jax.random.normal(kg, (dim,), dtype=jnp.float32)
        beta = 0.1 * jax.random.normal(kb, (dim,), dtype=jnp.float32)
        rmean = 0.1 * jax.random.normal(km, (dim,), dtype=jnp.float32)
        rvar = 1.0 + 0.1 * jnp.abs(jax.random.normal(kv, (dim,), dtype=jnp.float32))
        scale = gamma / jnp.sqrt(rvar + 1e-5)        # inference-mode BN fold
        shift = beta - rmean * scale
        return scale, shift

    bn1_s, bn1_b = bn(ks[3], twoc)
    fc1_w, fc1_b = n(ks[4], (h1, twoc), 0.03), n(ks[5], (h1,), 0.01)
    bn2_s, bn2_b = bn(ks[6], h1)
    fc2_w, fc2_b = n(ks[7], (h2, h1), 0.05), n(ks[8], (h2,), 0.01)
    bn3_s, bn3_b = bn(ks[9], h2)
    fc3_w = n(ks[10], (num_classes, h2), 0.08)
    fc3_b = 0.01 * jnp.ones((num_classes,), jnp.float32)

    return dict(ca_w1=ca_w1, ca_w2=ca_w2, sa_w=sa_w,
                bn1_s=bn1_s, bn1_b=bn1_b, fc1_w=fc1_w, fc1_b=fc1_b,
                bn2_s=bn2_s, bn2_b=bn2_b, fc2_w=fc2_w, fc2_b=fc2_b,
                bn3_s=bn3_s, bn3_b=bn3_b, fc3_w=fc3_w, fc3_b=fc3_b)


def fold_params(raw, weight_dtype=jnp.bfloat16):
    """Fold BN layers + the [x, x] concat into the FC weights, pad to lane-friendly shapes,
    cast weights to bf16, and pack all FC bias vectors into one block."""
    c = raw["ca_w2"].shape[0]
    cr = raw["ca_w1"].shape[0]
    h1 = raw["fc1_w"].shape[0]
    h2 = raw["fc2_w"].shape[0]
    nc = raw["fc3_w"].shape[0]

    cr_pad = _round_up(cr)
    out_pad = _round_up(nc)

    # Channel-attention MLP, transposed; bottleneck zero-padded to a full 128-lane tile.
    ca_w1T = jnp.zeros((c, cr_pad), jnp.float32).at[:, :cr].set(raw["ca_w1"].T)
    ca_w2T = jnp.zeros((cr_pad, c), jnp.float32).at[:cr, :].set(raw["ca_w2"].T)

    # BN1 + concat([x_sa, x_sa]) folded into fc1 (halves fc1's K: 2C -> C).
    fc1_wT = raw["fc1_w"].T                                   # (2C, H1)
    w1 = (raw["bn1_s"][:c, None] * fc1_wT[:c, :]
          + raw["bn1_s"][c:, None] * fc1_wT[c:, :])           # (C, H1)
    b1 = raw["bn1_b"] @ fc1_wT + raw["fc1_b"]                 # (H1,)

    # BN2 -> fc2, BN3 -> fc3.
    fc2_wT = raw["fc2_w"].T                                   # (H1, H2)
    w2 = raw["bn2_s"][:, None] * fc2_wT
    b2 = raw["bn2_b"] @ fc2_wT + raw["fc2_b"]                 # (H2,)
    fc3_wT = raw["fc3_w"].T                                   # (H2, NC)
    w3 = jnp.zeros((h2, out_pad), jnp.float32).at[:, :nc].set(raw["bn3_s"][:, None] * fc3_wT)
    b3 = jnp.zeros((out_pad,), jnp.float32).at[:nc].set(raw["bn3_b"] @ fc3_wT + raw["fc3_b"])

    # Pack FC biases into one f32 VMEM block; spatial-attn center taps go to SMEM separately.
    pad = max(_round_up(h1), _round_up(h2), out_pad)
    bias = jnp.zeros((3, pad), jnp.float32)
    bias = bias.at[0, :h1].set(b1).at[1, :h2].set(b2).at[2, :out_pad].set(b3)
    sa_w = raw["sa_w"].astype(jnp.float32)                    # (2,)

    return dict(
        ca_w1T=ca_w1T.astype(weight_dtype), ca_w2T=ca_w2T.astype(weight_dtype),
        w1=w1.astype(weight_dtype), w2=w2.astype(weight_dtype), w3=w3.astype(weight_dtype),
        bias=bias, sa_w=sa_w)


# --------------------------------------------------------------------------------------
# Forward wrapper
# --------------------------------------------------------------------------------------
@jax.jit
def _forward_padded(params, x):
    b, c = x.shape
    out_pad = params["w3"].shape[1]
    x = x.astype(jnp.bfloat16)                   # stream features as bf16 (halves x HBM/VMEM)

    is_v7 = _is_v7()
    bt = _pick_batch_tile(b, is_v7)
    pad_b = (-b) % bt
    if pad_b:
        x = jnp.pad(x, ((0, pad_b), (0, 0)))
    bp = b + pad_b
    grid = (bp // bt,)

    def resident(shape):
        # Weights/bias: constant block index -> stays VMEM-resident; single-buffered
        # (no re-DMA across grid steps, so the second pipeline copy would be wasted VMEM).
        return pl.BlockSpec(shape, lambda i: (0, 0), pipeline_mode=pl.Buffered(1))

    in_specs = [
        pl.BlockSpec((bt, c), lambda i: (i, 0)),              # x: tiled over batch
        resident(params["ca_w1T"].shape),
        resident(params["ca_w2T"].shape),
        resident(params["w1"].shape),
        resident(params["w2"].shape),
        resident(params["w3"].shape),
        resident(params["bias"].shape),
        pl.BlockSpec(memory_space=pltpu.MemorySpace.SMEM),    # spatial-attn taps (scalars)
    ]

    # Right-size the VMEM limit: single-buffered weights + double-buffered x/out tiles
    # + generous headroom for the f32 body temporaries.
    weight_bytes = sum(int(params[k].size) * params[k].dtype.itemsize
                       for k in ("ca_w1T", "ca_w2T", "w1", "w2", "w3", "bias"))
    io_bytes = 2 * (bt * c * x.dtype.itemsize + bt * out_pad * 4)
    temp_bytes = 8 * bt * c * 4
    cap = (60 if is_v7 else 112) * 1024 * 1024
    vmem_limit = int(max(min(int(1.25 * (weight_bytes + io_bytes + temp_bytes)), cap),
                         32 * 1024 * 1024))

    crp = params["ca_w1T"].shape[1]
    h1d = params["w1"].shape[1]
    h2d = params["w2"].shape[1]
    cost = pl.CostEstimate(
        flops=int(2 * bp * (2 * c * crp + c * h1d + h1d * h2d + h2d * out_pad)),
        transcendentals=int(bp * (c + 1)),
        bytes_accessed=int(weight_bytes + bp * c * x.dtype.itemsize + bp * out_pad * 4),
    )

    return pl.pallas_call(
        xception_cbam_head_kernel,
        out_shape=jax.ShapeDtypeStruct((bp, out_pad), jnp.float32),
        grid=grid,
        in_specs=in_specs,
        out_specs=pl.BlockSpec((bt, out_pad), lambda i: (i, 0)),
        compiler_params=pltpu.CompilerParams(
            dimension_semantics=("parallel",),          # shard batch tiles across v7x cores
            vmem_limit_bytes=vmem_limit,
        ),
        cost_estimate=cost,
    )(x, params["ca_w1T"], params["ca_w2T"],
      params["w1"], params["w2"], params["w3"], params["bias"], params["sa_w"])


def forward(params, x, num_classes):
    out = _forward_padded(params, x)
    return out[: x.shape[0], :num_classes]


# --------------------------------------------------------------------------------------
# References (for correctness checking)
# --------------------------------------------------------------------------------------
def reference_original(raw, x):
    """Pure-JAX f32 reference of the original (un-folded) module forward."""
    mlp = jnp.maximum(x @ raw["ca_w1"].T, 0.0) @ raw["ca_w2"].T
    x_ca = x * jax.nn.sigmoid(mlp + mlp)
    avg_c = jnp.mean(x_ca, axis=1, keepdims=True)
    max_c = jnp.max(x_ca, axis=1, keepdims=True)
    x_sa = x_ca * jax.nn.sigmoid(raw["sa_w"][0] * avg_c + raw["sa_w"][1] * max_c)
    combined = jnp.concatenate([x_sa, x_sa], axis=1)
    z = combined * raw["bn1_s"] + raw["bn1_b"]
    h1 = jnp.maximum(z @ raw["fc1_w"].T + raw["fc1_b"], 0.0)
    h1 = h1 * raw["bn2_s"] + raw["bn2_b"]
    h2 = jnp.maximum(h1 @ raw["fc2_w"].T + raw["fc2_b"], 0.0)
    h2 = h2 * raw["bn3_s"] + raw["bn3_b"]
    return h2 @ raw["fc3_w"].T + raw["fc3_b"]


def reference_folded(p, x, num_classes):
    """Pure-JAX reference using the same folded/bf16 parameters + bf16 x as the kernel."""
    wdt = p["ca_w1T"].dtype
    xl = x.astype(wdt)
    h = jnp.maximum(jnp.dot(xl, p["ca_w1T"], preferred_element_type=jnp.float32), 0.0)
    mlp = jnp.dot(h.astype(wdt), p["ca_w2T"], preferred_element_type=jnp.float32)
    x_ca = xl.astype(jnp.float32) * jax.nn.sigmoid(mlp + mlp)
    avg_c = jnp.mean(x_ca, axis=1, keepdims=True)
    max_c = jnp.max(x_ca, axis=1, keepdims=True)
    x_sa = x_ca * jax.nn.sigmoid(avg_c * p["sa_w"][0] + max_c * p["sa_w"][1])
    bias = p["bias"]
    h1d, h2d, od = p["w1"].shape[1], p["w2"].shape[1], p["w3"].shape[1]
    h1 = jnp.maximum(
        jnp.dot(x_sa.astype(wdt), p["w1"], preferred_element_type=jnp.float32) + bias[0, :h1d], 0.0)
    h2 = jnp.maximum(
        jnp.dot(h1.astype(wdt), p["w2"], preferred_element_type=jnp.float32) + bias[1, :h2d], 0.0)
    out = jnp.dot(h2.astype(wdt), p["w3"], preferred_element_type=jnp.float32) + bias[2, :od]
    return out[:, :num_classes]


# --------------------------------------------------------------------------------------
if __name__ == "__main__":
    key = jax.random.PRNGKey(0)
    k_x, k_p = jax.random.split(key)

    BATCH, FEATURE_DIM, RATIO = 4, 256, 8
    H1, H2, NUM_CLASSES = 128, 64, 3

    # x plays the role of backbone(image): the pooled (B, feature_dim) inception_v3 output.
    backbone_features = jax.random.normal(k_x, (BATCH, FEATURE_DIM), dtype=jnp.float32)
    raw = init_raw_params(k_p, FEATURE_DIM, RATIO, H1, H2, NUM_CLASSES)
    params = fold_params(raw)

    out = jax.block_until_ready(forward(params, backbone_features, NUM_CLASSES))

    ref_folded = reference_folded(params, backbone_features, NUM_CLASSES)
    ref_f32 = reference_original(raw, backbone_features)

    assert out.shape == (BATCH, NUM_CLASSES), out.shape
    assert bool(jnp.all(jnp.isfinite(out))), "non-finite output"
    # Kernel matches a JAX run of the identical folded/bf16 math tightly...
    assert jnp.allclose(out, ref_folded, rtol=1e-3, atol=1e-3), \
        "Pallas kernel mismatch vs folded bf16 reference"
    # ...and the folding + bf16 cast stays faithful to the original f32 module semantics.
    assert jnp.allclose(out, ref_f32, rtol=3e-2, atol=3e-2), \
        "Pallas kernel mismatch vs original f32 reference"
    print("KERNEL_OK")
</pallas_src>

<mosaic_0001>
module attributes {stable_mosaic.version = 11 : i64} {
  func.func @xception_cbam_head_kernel(%arg0: i32, %arg1: memref<8x256xbf16, #tpu.memory_space<vmem>>, %arg2: memref<256x128xbf16, #tpu.memory_space<vmem>>, %arg3: memref<128x256xbf16, #tpu.memory_space<vmem>>, %arg4: memref<256x128xbf16, #tpu.memory_space<vmem>>, %arg5: memref<128x64xbf16, #tpu.memory_space<vmem>>, %arg6: memref<64x128xbf16, #tpu.memory_space<vmem>>, %arg7: memref<3x128xf32, #tpu.memory_space<vmem>>, %arg8: memref<2xf32, #tpu.memory_space<smem>>, %arg9: memref<8x128xf32, #tpu.memory_space<vmem>>) attributes {dimension_semantics = [#tpu.dimension_semantics<parallel>], iteration_bounds = array<i64: 1>, scalar_prefetch = 0 : i64, scratch_operands = 0 : i64, tpu.core_type = #tpu.core_type<tc>, window_params = [{transform_indices = @transform_0, window_bounds = array<i64: 8, 256>}, {pipeline_mode = #tpu.pipeline_mode<synchronous>, transform_indices = @transform_1, window_bounds = array<i64: 256, 128>}, {pipeline_mode = #tpu.pipeline_mode<synchronous>, transform_indices = @transform_2, window_bounds = array<i64: 128, 256>}, {pipeline_mode = #tpu.pipeline_mode<synchronous>, transform_indices = @transform_3, window_bounds = array<i64: 256, 128>}, {pipeline_mode = #tpu.pipeline_mode<synchronous>, transform_indices = @transform_4, window_bounds = array<i64: 128, 64>}, {pipeline_mode = #tpu.pipeline_mode<synchronous>, transform_indices = @transform_5, window_bounds = array<i64: 64, 128>}, {pipeline_mode = #tpu.pipeline_mode<synchronous>, transform_indices = @transform_6, window_bounds = array<i64: 3, 128>}, {transform_indices = @transform_7, window_bounds = array<i64: 2>}, {transform_indices = @transform_8, window_bounds = array<i64: 8, 128>}]} {
    %c0 = arith.constant 0 : index
    %c0_0 = arith.constant 0 : index
    %0 = vector.load %arg1[%c0, %c0_0] : memref<8x256xbf16, #tpu.memory_space<vmem>>, vector<8x256xbf16>
    %c0_1 = arith.constant 0 : index
    %c0_2 = arith.constant 0 : index
    %1 = vector.load %arg2[%c0_1, %c0_2] : memref<256x128xbf16, #tpu.memory_space<vmem>>, vector<256x128xbf16>
    %cst = arith.constant dense<0.000000e+00> : vector<8x128xf32>
    %2 = tpu.matmul %0, %1, %cst {dimension_numbers = #tpu.dot_dimension_numbers<[1], [0], [0], [1], [0, 0, 1, 1], [], []>} : vector<8x256xbf16>, vector<256x128xbf16>, vector<8x128xf32> -> vector<8x128xf32>
    %cst_3 = arith.constant 0.000000e+00 : f32
    %3 = vector.broadcast %cst_3 : f32 to vector<8x128xf32>
    %4 = arith.maximumf %2, %3 : vector<8x128xf32>
    %5 = arith.truncf %4 : vector<8x128xf32> to vector<8x128xbf16>
    %c0_4 = arith.constant 0 : index
    %c0_5 = arith.constant 0 : index
    %6 = vector.load %arg3[%c0_4, %c0_5] : memref<128x256xbf16, #tpu.memory_space<vmem>>, vector<128x256xbf16>
    %cst_6 = arith.constant dense<0.000000e+00> : vector<8x256xf32>
    %7 = tpu.matmul %5, %6, %cst_6 {dimension_numbers = #tpu.dot_dimension_numbers<[1], [0], [0], [1], [0, 0, 1, 1], [], []>} : vector<8x128xbf16>, vector<128x256xbf16>, vector<8x256xf32> -> vector<8x256xf32>
    %8 = arith.extf %0 : vector<8x256xbf16> to vector<8x256xf32>
    %9 = arith.addf %7, %7 : vector<8x256xf32>
    %10 = arith.negf %9 : vector<8x256xf32>
    %11 = math.exp %10 : vector<8x256xf32>
    %cst_7 = arith.constant 1.000000e+00 : f32
    %12 = vector.broadcast %cst_7 : f32 to vector<8x256xf32>
    %13 = arith.addf %12, %11 : vector<8x256xf32>
    %14 = arith.divf %12, %13 : vector<8x256xf32>
    %15 = arith.mulf %8, %14 : vector<8x256xf32>
    %cst_8 = arith.constant dense<0.000000e+00> : vector<8xf32>
    %16 = vector.multi_reduction <add>, %15, %cst_8 [1] : vector<8x256xf32> to vector<8xf32>
    %17 = vector.shape_cast %16 : vector<8xf32> to vector<8x1xf32>
    %cst_9 = arith.constant 2.560000e+02 : f32
    %18 = vector.broadcast %cst_9 : f32 to vector<8x1xf32>
    %19 = arith.divf %17, %18 : vector<8x1xf32>
    %cst_10 = arith.constant dense<0xFF800000> : vector<8xf32>
    %20 = vector.multi_reduction <maximumf>, %15, %cst_10 [1] : vector<8x256xf32> to vector<8xf32>
    %21 = vector.shape_cast %20 : vector<8xf32> to vector<8x1xf32>
    %c0_11 = arith.constant 0 : index
    %22 = memref.load %arg8[%c0_11] : memref<2xf32, #tpu.memory_space<smem>>
    %23 = vector.broadcast %22 : f32 to vector<8x1xf32>
    %24 = arith.mulf %19, %23 : vector<8x1xf32>
    %c1 = arith.constant 1 : index
    %25 = memref.load %arg8[%c1] : memref<2xf32, #tpu.memory_space<smem>>
    %26 = vector.broadcast %25 : f32 to vector<8x1xf32>
    %27 = arith.mulf %21, %26 : vector<8x1xf32>
    %28 = arith.addf %24, %27 : vector<8x1xf32>
    %29 = arith.negf %28 : vector<8x1xf32>
    %30 = math.exp %29 : vector<8x1xf32>
    %cst_12 = arith.constant 1.000000e+00 : f32
    %31 = vector.broadcast %cst_12 : f32 to vector<8x1xf32>
    %32 = arith.addf %31, %30 : vector<8x1xf32>
    %33 = arith.divf %31, %32 : vector<8x1xf32>
    %34 = vector.broadcast %33 : vector<8x1xf32> to vector<8x256xf32>
    %35 = arith.mulf %15, %34 : vector<8x256xf32>
    %c0_13 = arith.constant 0 : index
    %c0_14 = arith.constant 0 : index
    %36 = vector.load %arg7[%c0_13, %c0_14] : memref<3x128xf32, #tpu.memory_space<vmem>>, vector<1x128xf32>
    %c1_15 = arith.constant 1 : index
    %c0_16 = arith.constant 0 : index
    %37 = vector.load %arg7[%c1_15, %c0_16] : memref<3x128xf32, #tpu.memory_space<vmem>>, vector<1x64xf32>
    %c2 = arith.constant 2 : index
    %c0_17 = arith.constant 0 : index
    %38 = vector.load %arg7[%c2, %c0_17] : memref<3x128xf32, #tpu.memory_space<vmem>>, vector<1x128xf32>
    %39 = arith.truncf %35 : vector<8x256xf32> to vector<8x256xbf16>
    %c0_18 = arith.constant 0 : index
    %c0_19 = arith.constant 0 : index
    %40 = vector.load %arg4[%c0_18, %c0_19] : memref<256x128xbf16, #tpu.memory_space<vmem>>, vector<256x128xbf16>
    %cst_20 = arith.constant dense<0.000000e+00> : vector<8x128xf32>
    %41 = tpu.matmul %39, %40, %cst_20 {dimension_numbers = #tpu.dot_dimension_numbers<[1], [0], [0], [1], [0, 0, 1, 1], [], []>} : vector<8x256xbf16>, vector<256x128xbf16>, vector<8x128xf32> -> vector<8x128xf32>
    %42 = vector.broadcast %36 : vector<1x128xf32> to vector<8x128xf32>
    %43 = arith.addf %41, %42 : vector<8x128xf32>
    %cst_21 = arith.constant 0.000000e+00 : f32
    %44 = vector.broadcast %cst_21 : f32 to vector<8x128xf32>
    %45 = arith.maximumf %43, %44 : vector<8x128xf32>
    %46 = arith.truncf %45 : vector<8x128xf32> to vector<8x128xbf16>
    %c0_22 = arith.constant 0 : index
    %c0_23 = arith.constant 0 : index
    %47 = vector.load %arg5[%c0_22, %c0_23] : memref<128x64xbf16, #tpu.memory_space<vmem>>, vector<128x64xbf16>
    %cst_24 = arith.constant dense<0.000000e+00> : vector<8x64xf32>
    %48 = tpu.matmul %46, %47, %cst_24 {dimension_numbers = #tpu.dot_dimension_numbers<[1], [0], [0], [1], [0, 0, 1, 1], [], []>} : vector<8x128xbf16>, vector<128x64xbf16>, vector<8x64xf32> -> vector<8x64xf32>
    %49 = vector.broadcast %37 : vector<1x64xf32> to vector<8x64xf32>
    %50 = arith.addf %48, %49 : vector<8x64xf32>
    %cst_25 = arith.constant 0.000000e+00 : f32
    %51 = vector.broadcast %cst_25 : f32 to vector<8x64xf32>
    %52 = arith.maximumf %50, %51 : vector<8x64xf32>
    %53 = arith.truncf %52 : vector<8x64xf32> to vector<8x64xbf16>
    %c0_26 = arith.constant 0 : index
    %c0_27 = arith.constant 0 : index
    %54 = vector.load %arg6[%c0_26, %c0_27] : memref<64x128xbf16, #tpu.memory_space<vmem>>, vector<64x128xbf16>
    %cst_28 = arith.constant dense<0.000000e+00> : vector<8x128xf32>
    %55 = tpu.matmul %53, %54, %cst_28 {dimension_numbers = #tpu.dot_dimension_numbers<[1], [0], [0], [1], [0, 0, 1, 1], [], []>} : vector<8x64xbf16>, vector<64x128xbf16>, vector<8x128xf32> -> vector<8x128xf32>
    %56 = vector.broadcast %38 : vector<1x128xf32> to vector<8x128xf32>
    %57 = arith.addf %55, %56 : vector<8x128xf32>
    %c0_29 = arith.constant 0 : index
    %c0_30 = arith.constant 0 : index
    %58 = vector.load %arg9[%c0_29, %c0_30] : memref<8x128xf32, #tpu.memory_space<vmem>>, vector<8x128xf32>
    tpu.vector_store %arg9[%c0_29, %c0_30], %57 {strides = array<i32>} : memref<8x128xf32, #tpu.memory_space<vmem>>, vector<8x128xf32>,
    return
  }
  func.func @transform_0(%arg0: i32) -> (i32, i32) {
    %c0_i32 = arith.constant 0 : i32
    %c0_i32_0 = arith.constant 0 : i32
    return %arg0, %c0_i32 : i32, i32
  }
  func.func @transform_1(%arg0: i32) -> (i32, i32) {
    %c0_i32 = arith.constant 0 : i32
    %c0_i32_0 = arith.constant 0 : i32
    %c0_i32_1 = arith.constant 0 : i32
    return %c0_i32, %c0_i32_0 : i32, i32
  }
  func.func @transform_2(%arg0: i32) -> (i32, i32) {
    %c0_i32 = arith.constant 0 : i32
    %c0_i32_0 = arith.constant 0 : i32
    %c0_i32_1 = arith.constant 0 : i32
    return %c0_i32, %c0_i32_0 : i32, i32
  }
  func.func @transform_3(%arg0: i32) -> (i32, i32) {
    %c0_i32 = arith.constant 0 : i32
    %c0_i32_0 = arith.constant 0 : i32
    %c0_i32_1 = arith.constant 0 : i32
    return %c0_i32, %c0_i32_0 : i32, i32
  }
  func.func @transform_4(%arg0: i32) -> (i32, i32) {
    %c0_i32 = arith.constant 0 : i32
    %c0_i32_0 = arith.constant 0 : i32
    %c0_i32_1 = arith.constant 0 : i32
    return %c0_i32, %c0_i32_0 : i32, i32
  }
  func.func @transform_5(%arg0: i32) -> (i32, i32) {
    %c0_i32 = arith.constant 0 : i32
    %c0_i32_0 = arith.constant 0 : i32
    %c0_i32_1 = arith.constant 0 : i32
    return %c0_i32, %c0_i32_0 : i32, i32
  }
  func.func @transform_6(%arg0: i32) -> (i32, i32) {
    %c0_i32 = arith.constant 0 : i32
    %c0_i32_0 = arith.constant 0 : i32
    %c0_i32_1 = arith.constant 0 : i32
    return %c0_i32, %c0_i32_0 : i32, i32
  }
  func.func @transform_7(%arg0: i32) -> i32 {
    %c0_i32 = arith.constant 0 : i32
    %c0_i32_0 = arith.constant 0 : i32
    return %c0_i32 : i32
  }
  func.func @transform_8(%arg0: i32) -> (i32, i32) {
    %c0_i32 = arith.constant 0 : i32
    %c0_i32_0 = arith.constant 0 : i32
    return %arg0, %c0_i32 : i32, i32
  }
}

</mosaic_0001>

<llo_original>
// kernel: _forward_padded.1
$region0: #{_forward_padded.1}
  #allocation0 [shape = 'u32[]', space=smem, size = 0x4, offset = 0x4, fixed_abs, tag = 'smem constant byte address 0x4 - core index']
  #allocation1 [shape = 'u32[144,128]{1,0:T(1,128)}', space=vmem, size = 0x12000, scoped, tag = 'internal scratch']
  %s0 = inlined_call_operand.vmem [shape: bf16[8,256], index: 0, kind: input, shape index: {}]
  %s1 = inlined_call_operand.hbm [shape: bf16[256,128], index: 1, kind: input, shape index: {}]
  %s2 = inlined_call_operand.hbm [shape: bf16[128,256], index: 2, kind: input, shape index: {}]
  %s3 = inlined_call_operand.vmem [shape: bf16[256,128], index: 3, kind: input, shape index: {}]
  %s4 = inlined_call_operand.vmem [shape: bf16[128,64], index: 4, kind: input, shape index: {}]
  %s5 = inlined_call_operand.hbm [shape: bf16[64,128], index: 5, kind: input, shape index: {}]
  %s6 = inlined_call_operand.hbm [shape: f32[3,128], index: 6, kind: input, shape index: {}]
  %s7 = inlined_call_operand.hbm [shape: f32[2], index: 7, kind: input, shape index: {}]
  %s8 = inlined_call_operand.hbm [shape: f32[8,128], index: 8, kind: output, shape index: {}]
  %s9 = sld [smem:[#allocation0]]
  $region62: #{_forward_padded.1} parent=0
    _
  %s11 = ssub.s32 1, %s9
  %s12 = scalar_select 0, %s11, %s9
  $region1: #{_forward_padded.1} parent=0
    #allocation2 [shape = 'u8[65536]{0}', space=vmem, size = 0x10000, scoped, tag = 'input window, operand 1, single buffered']
    #allocation3 [shape = 's32[1]{0}', space=sflag, size = 0x4, scoped, tag = 'scoped memory for _forward_padded.1']
    #allocation4 [shape = 's32[1]{0}', space=sflag, size = 0x4, scoped, tag = 'scoped memory for _forward_padded.1']
    #allocation5 [shape = 's32[1]{0}', space=sflag, size = 0x4, scoped, tag = 'scoped memory for _forward_padded.1']
    #allocation6 [shape = 'u8[65536]{0}', space=vmem, size = 0x10000, scoped, tag = 'input window, operand 2, single buffered']
    #allocation7 [shape = 's32[1]{0}', space=sflag, size = 0x4, scoped, tag = 'scoped memory for _forward_padded.1']
    #allocation8 [shape = 'u8[16384]{0}', space=vmem, size = 0x4000, scoped, tag = 'input window, operand 5, single buffered']
    #allocation9 [shape = 'u8[2048]{0}', space=vmem, size = 0x800, scoped, tag = 'input window, operand 6, single buffered']
    #allocation10 [shape = 's32[1]{0}', space=sflag, size = 0x4, scoped, tag = 'scoped memory for _forward_padded.1']
    #allocation11 [shape = 'u8[512]{0}', space=smem, size = 0x200, scoped, tag = 'input window, operand 7, single buffered']
    #allocation12 [shape = 'u8[4096]{0}', space=vmem, size = 0x1000, scoped, tag = 'output window, operand 0, single buffered']
    %13 = vsyncpa [#allocation3], 0
    %14 = vsyncpa [#allocation7], 0
    %15 = vsyncpa [#allocation10], 0
    %16 = vsyncpa [#allocation5], 0
    %17 = vsyncpa [#allocation4], 0
    // Predicated region
    $region2: #{_forward_padded.1} parent=1 // pred_check
      _
    $region3: #{_forward_padded.1} parent=1 // pred_check_branch
      %19 = sbr.rel (0) target = $region5
    $region4: #{_forward_padded.1} parent=1 // pred_region
      _
    $region5: #{_forward_padded.1} parent=1 // pred_fallthru
      _
    // Predicated region
    $region6: #{_forward_padded.1} parent=1 // pred_check
      _
    $region7: #{_forward_padded.1} parent=1 // pred_check_branch
      %21 = sbr.rel (0) target = $region9
    $region8: #{_forward_padded.1} parent=1 // pred_region
      %s23 = ssub.s32 2048, 2048
      %24 = vsyncadd [#allocation3], %s23
      %s25 = sshll.u32 [#allocation2], 4
      %s26 = int_to_ptr.vmem [resolvable:$true] %s25
      %31 = dma.hbm_to_vmem [thread:$0]  %s1, 2048, %s26, [#allocation3], 64, 64, 4
    $region9: #{_forward_padded.1} parent=1 // pred_fallthru
      _
    // Predicated region
    $region10: #{_forward_padded.1} parent=1 // pred_check
      _
    $region11: #{_forward_padded.1} parent=1 // pred_check_branch
      %33 = sbr.rel (0) target = $region13
    $region12: #{_forward_padded.1} parent=1 // pred_region
      %s35 = ssub.s32 2048, 2048
      %36 = vsyncadd [#allocation7], %s35
      %s37 = sshll.u32 [#allocation6], 4
      %s38 = int_to_ptr.vmem [resolvable:$true] %s37
      %43 = dma.hbm_to_vmem [thread:$0]  %s2, 2048, %s38, [#allocation7], 128, 128, 8
    $region13: #{_forward_padded.1} parent=1 // pred_fallthru
      _
    // Predicated region
    $region14: #{_forward_padded.1} parent=1 // pred_check
      _
    $region15: #{_forward_padded.1} parent=1 // pred_check_branch
      %45 = sbr.rel (0) target = $region17
    $region16: #{_forward_padded.1} parent=1 // pred_region
      _
    $region17: #{_forward_padded.1} parent=1 // pred_fallthru
      _
    // Predicated region
    $region18: #{_forward_padded.1} parent=1 // pred_check
      _
    $region19: #{_forward_padded.1} parent=1 // pred_check_branch
      %47 = sbr.rel (0) target = $region21
    $region20: #{_forward_padded.1} parent=1 // pred_region
      _
    $region21: #{_forward_padded.1} parent=1 // pred_fallthru
      _
    // Predicated region
    $region22: #{_forward_padded.1} parent=1 // pred_check
      _
    $region23: #{_forward_padded.1} parent=1 // pred_check_branch
      %49 = sbr.rel (0) target = $region25
    $region24: #{_forward_padded.1} parent=1 // pred_region
      %s51 = ssub.s32 512, 512
      %52 = vsyncadd [#allocation7], %s51
      %s53 = sshll.u32 [#allocation8], 4
      %s54 = int_to_ptr.vmem [resolvable:$true] %s53
      %59 = dma.hbm_to_vmem [thread:$0]  %s5, 512, %s54, [#allocation7], 64, 64, 4
    $region25: #{_forward_padded.1} parent=1 // pred_fallthru
      _
    // Predicated region
    $region26: #{_forward_padded.1} parent=1 // pred_check
      _
    $region27: #{_forward_padded.1} parent=1 // pred_check_branch
      %61 = sbr.rel (0) target = $region29
    $region28: #{_forward_padded.1} parent=1 // pred_region
      %s63 = ssub.s32 64, 64
      %64 = vsyncadd [#allocation10], %s63
      %s66 = sshll.u32 [#allocation9], 4
      %s67 = int_to_ptr.vmem [resolvable:$true] %s66
      %69 = dma.hbm_to_vmem [thread:$0]  %s6, 64, %s67, [#allocation10]
    $region29: #{_forward_padded.1} parent=1 // pred_fallthru
      _
    // Predicated region
    $region30: #{_forward_padded.1} parent=1 // pred_check
      _
    $region31: #{_forward_padded.1} parent=1 // pred_check_branch
      %71 = sbr.rel (0) target = $region33
    $region32: #{_forward_padded.1} parent=1 // pred_region
      %s73 = ssub.s32 16, 16
      %74 = vsyncadd [#allocation5], %s73
      %77 = dma.hbm_to_smem %s7, 16, [#allocation11], [#allocation5]
    $region33: #{_forward_padded.1} parent=1 // pred_fallthru
      _
    // Predicated region
    $region34: #{_forward_padded.1} parent=1 // pred_check
      _
    $region35: #{_forward_padded.1} parent=1 // pred_check_branch
      %79 = sbr.rel (0) target = $region37
    $region36: #{_forward_padded.1} parent=1 // pred_region
      %80 = dma.done [#allocation3], 2048
    $region37: #{_forward_padded.1} parent=1 // pred_fallthru
      _
    // Predicated region
    $region38: #{_forward_padded.1} parent=1 // pred_check
      _
    $region39: #{_forward_padded.1} parent=1 // pred_check_branch
      %82 = sbr.rel (0) target = $region41
    $region40: #{_forward_padded.1} parent=1 // pred_region
      %83 = dma.done [#allocation7], 2048
    $region41: #{_forward_padded.1} parent=1 // pred_fallthru
      _
    // Predicated region
    $region42: #{_forward_padded.1} parent=1 // pred_check
      _
    $region43: #{_forward_padded.1} parent=1 // pred_check_branch
      %85 = sbr.rel (0) target = $region45
    $region44: #{_forward_padded.1} parent=1 // pred_region
      %86 = dma.done [#allocation7], 512
    $region45: #{_forward_padded.1} parent=1 // pred_fallthru
      _
    // Predicated region
    $region46: #{_forward_padded.1} parent=1 // pred_check
      _
    $region47: #{_forward_padded.1} parent=1 // pred_check_branch
      %88 = sbr.rel (0) target = $region49
    $region48: #{_forward_padded.1} parent=1 // pred_region
      %89 = dma.done [#allocation10], 64
    $region49: #{_forward_padded.1} parent=1 // pred_fallthru
      _
    // Predicated region
    $region50: #{_forward_padded.1} parent=1 // pred_check
      _
    $region51: #{_forward_padded.1} parent=1 // pred_check_branch
      %91 = sbr.rel (0) target = $region53
    $region52: #{_forward_padded.1} parent=1 // pred_region
      %92 = dma.done [#allocation5], 16
    $region53: #{_forward_padded.1} parent=1 // pred_fallthru
      _
    %93 = sfence
    %v95 = vld [vmem:[%s0] sm:$0xff]
    %v96 = vld [vmem:[#allocation2] sm:$0xf]
    %v97 = vld [vmem:[#allocation2 + $0x4] sm:$0xf]
    %v98 = vld [vmem:[#allocation2 + $0x8] sm:$0xf]
    %v99 = vld [vmem:[#allocation2 + $0xc] sm:$0xf]
    %v100 = vld [vmem:[#allocation2 + $0x10] sm:$0xf]
    %v101 = vld [vmem:[#allocation2 + $0x14] sm:$0xf]
    %v102 = vld [vmem:[#allocation2 + $0x18] sm:$0xf]
    %v103 = vld [vmem:[#allocation2 + $0x1c] sm:$0xf]
    %v104 = vld [vmem:[#allocation2 + $0x20] sm:$0xf]
    %v105 = vld [vmem:[#allocation2 + $0x24] sm:$0xf]
    %v106 = vld [vmem:[#allocation2 + $0x28] sm:$0xf]
    %v107 = vld [vmem:[#allocation2 + $0x2c] sm:$0xf]
    %v108 = vld [vmem:[#allocation2 + $0x30] sm:$0xf]
    %v109 = vld [vmem:[#allocation2 + $0x34] sm:$0xf]
    %v110 = vld [vmem:[#allocation2 + $0x38] sm:$0xf]
    %v111 = vld [vmem:[#allocation2 + $0x3c] sm:$0xf]
    %v112 = vld [vmem:[#allocation2 + $0x40] sm:$0xf]
    %v113 = vld [vmem:[#allocation2 + $0x44] sm:$0xf]
    %v114 = vld [vmem:[#allocation2 + $0x48] sm:$0xf]
    %v115 = vld [vmem:[#allocation2 + $0x4c] sm:$0xf]
    %v116 = vld [vmem:[#allocation2 + $0x50] sm:$0xf]
    %v117 = vld [vmem:[#allocation2 + $0x54] sm:$0xf]
    %v118 = vld [vmem:[#allocation2 + $0x58] sm:$0xf]
    %v119 = vld [vmem:[#allocation2 + $0x5c] sm:$0xf]
    %v120 = vld [vmem:[#allocation2 + $0x60] sm:$0xf]
    %v121 = vld [vmem:[#allocation2 + $0x64] sm:$0xf]
    %v122 = vld [vmem:[#allocation2 + $0x68] sm:$0xf]
    %v123 = vld [vmem:[#allocation2 + $0x6c] sm:$0xf]
    %v124 = vld [vmem:[#allocation2 + $0x70] sm:$0xf]
    %v125 = vld [vmem:[#allocation2 + $0x74] sm:$0xf]
    %v126 = vld [vmem:[#allocation2 + $0x78] sm:$0xf]
    %v127 = vld [vmem:[#allocation2 + $0x7c] sm:$0xf]
    %v129 = vunpack.c.l.b16 %v95
    %v130 = vunpack.c.h.b16 %v95
    %v131 = vpack.c.b16 %v129, %v129
    %v132 = vpack.c.b16 %v130, %v130
    %v167 = vunpack.c.l.b16 %v96
    %v168 = vunpack.c.l.b16 %v97
    %v169 = vunpack.c.l.b16 %v98
    %v170 = vunpack.c.l.b16 %v99
    %v171 = vunpack.c.l.b16 %v100
    %v172 = vunpack.c.l.b16 %v101
    %v173 = vunpack.c.l.b16 %v102
    %v174 = vunpack.c.l.b16 %v103
    %v175 = vunpack.c.l.b16 %v104
    %v176 = vunpack.c.l.b16 %v105
    %v177 = vunpack.c.l.b16 %v106
    %v178 = vunpack.c.l.b16 %v107
    %v179 = vunpack.c.l.b16 %v108
    %v180 = vunpack.c.l.b16 %v109
    %v181 = vunpack.c.l.b16 %v110
    %v182 = vunpack.c.l.b16 %v111
    %v183 = vunpack.c.l.b16 %v112
    %v184 = vunpack.c.l.b16 %v113
    %v185 = vunpack.c.l.b16 %v114
    %v186 = vunpack.c.l.b16 %v115
    %v187 = vunpack.c.l.b16 %v116
    %v188 = vunpack.c.l.b16 %v117
    %v189 = vunpack.c.l.b16 %v118
    %v190 = vunpack.c.l.b16 %v119
    %v191 = vunpack.c.l.b16 %v120
    %v192 = vunpack.c.l.b16 %v121
    %v193 = vunpack.c.l.b16 %v122
    %v194 = vunpack.c.l.b16 %v123
    %v195 = vunpack.c.l.b16 %v124
    %v196 = vunpack.c.l.b16 %v125
    %v197 = vunpack.c.l.b16 %v126
    %v198 = vunpack.c.l.b16 %v127
    %v199 = vpack.c.b16 %v168, %v167
    %v200 = vpack.c.b16 %v170, %v169
    %v201 = vpack.c.b16 %v172, %v171
    %v202 = vpack.c.b16 %v174, %v173
    %v203 = vpack.c.b16 %v176, %v175
    %v204 = vpack.c.b16 %v178, %v177
    %v205 = vpack.c.b16 %v180, %v179
    %v206 = vpack.c.b16 %v182, %v181
    %v207 = vpack.c.b16 %v184, %v183
    %v208 = vpack.c.b16 %v186, %v185
    %v209 = vpack.c.b16 %v188, %v187
    %v210 = vpack.c.b16 %v190, %v189
    %v211 = vpack.c.b16 %v192, %v191
    %v212 = vpack.c.b16 %v194, %v193
    %v213 = vpack.c.b16 %v196, %v195
    %v214 = vpack.c.b16 %v198, %v197
    %231 = vmatprep.subr.bf16.mxu0 0
    %232 = vmatpush1.bf16.msra.mxu0 %v206
    %233 = vmatprep.subr.bf16.mxu0 0
    %234 = vmatpush1.bf16.msra.mxu0 %v205
    %235 = vmatprep.subr.bf16.mxu0 0
    %236 = vmatpush1.bf16.msra.mxu0 %v204
    %237 = vmatprep.subr.bf16.mxu0 0
    %238 = vmatpush1.bf16.msra.mxu0 %v203
    %239 = vmatprep.subr.bf16.mxu0 0
    %240 = vmatpush1.bf16.msra.mxu0 %v202
    %241 = vmatprep.subr.bf16.mxu0 0
    %242 = vmatpush1.bf16.msra.mxu0 %v201
    %243 = vmatprep.subr.bf16.mxu0 0
    %244 = vmatpush1.bf16.msra.mxu0 %v200
    %245 = vmatprep.subr.bf16.mxu0 0
    %246 = vmatpush1.bf16.msra.mxu0 %v199
    %247 = vmatprep.subr.bf16.mxu0 0
    %248 = vmatpush2.bf16.msra.mxu0 %v214
    %249 = vmatprep.subr.bf16.mxu0 0
    %250 = vmatpush2.bf16.msra.mxu0 %v213
    %251 = vmatprep.subr.bf16.mxu0 0
    %252 = vmatpush2.bf16.msra.mxu0 %v212
    %253 = vmatprep.subr.bf16.mxu0 0
    %254 = vmatpush2.bf16.msra.mxu0 %v211
    %255 = vmatprep.subr.bf16.mxu0 0
    %256 = vmatpush2.bf16.msra.mxu0 %v210
    %257 = vmatprep.subr.bf16.mxu0 0
    %258 = vmatpush2.bf16.msra.mxu0 %v209
    %259 = vmatprep.subr.bf16.mxu0 0
    %260 = vmatpush2.bf16.msra.mxu0 %v208
    %261 = vmatprep.subr.bf16.mxu0 0
    %262 = vmatpush2.bf16.msra.mxu0 %v207
    %263 = vmatprep.mubr.bf16.mxu0 %v132
    %264 = vmatmul.mubr.bf16.gmra.mxu0 %v131
    %v265 = vpop.f32.mrf.mxu0
    %v266 = vadd.f32 0.0, %v265
    %v267 = vpop.f32.mrf.mxu0
    %v268 = vpop.f32.mrf.mxu0
    %v269 = vpop.f32.mrf.mxu0
    %270 = vdwg.mxu0
    %v271 = vmax.f32 %v266, 0.0
    %v272 = vpack.c.bf16 %v271, %v271
    %v273 = vld [vmem:[#allocation6] sm:$0xff]
    %v274 = vld [vmem:[#allocation6 + $0x8] sm:$0xff]
    %v275 = vld [vmem:[#allocation6 + $0x10] sm:$0xff]
    %v276 = vld [vmem:[#allocation6 + $0x18] sm:$0xff]
    %v277 = vld [vmem:[#allocation6 + $0x20] sm:$0xff]
    %v278 = vld [vmem:[#allocation6 + $0x28] sm:$0xff]
    %v279 = vld [vmem:[#allocation6 + $0x30] sm:$0xff]
    %v280 = vld [vmem:[#allocation6 + $0x38] sm:$0xff]
    %v281 = vld [vmem:[#allocation6 + $0x40] sm:$0xff]
    %v282 = vld [vmem:[#allocation6 + $0x48] sm:$0xff]
    %v283 = vld [vmem:[#allocation6 + $0x50] sm:$0xff]
    %v284 = vld [vmem:[#allocation6 + $0x58] sm:$0xff]
    %v285 = vld [vmem:[#allocation6 + $0x60] sm:$0xff]
    %v286 = vld [vmem:[#allocation6 + $0x68] sm:$0xff]
    %v287 = vld [vmem:[#allocation6 + $0x70] sm:$0xff]
    %v288 = vld [vmem:[#allocation6 + $0x78] sm:$0xff]
    %v305 = vunpack.c.l.b16 %v273
    %v306 = vunpack.c.h.b16 %v273
    %v307 = vunpack.c.l.b16 %v274
    %v308 = vunpack.c.h.b16 %v274
    %v309 = vunpack.c.l.b16 %v275
    %v310 = vunpack.c.h.b16 %v275
    %v311 = vunpack.c.l.b16 %v276
    %v312 = vunpack.c.h.b16 %v276
    %v313 = vunpack.c.l.b16 %v277
    %v314 = vunpack.c.h.b16 %v277
    %v315 = vunpack.c.l.b16 %v278
    %v316 = vunpack.c.h.b16 %v278
    %v317 = vunpack.c.l.b16 %v279
    %v318 = vunpack.c.h.b16 %v279
    %v319 = vunpack.c.l.b16 %v280
    %v320 = vunpack.c.h.b16 %v280
    %v321 = vunpack.c.l.b16 %v281
    %v322 = vunpack.c.h.b16 %v281
    %v323 = vunpack.c.l.b16 %v282
    %v324 = vunpack.c.h.b16 %v282
    %v325 = vunpack.c.l.b16 %v283
    %v326 = vunpack.c.h.b16 %v283
    %v327 = vunpack.c.l.b16 %v284
    %v328 = vunpack.c.h.b16 %v284
    %v329 = vunpack.c.l.b16 %v285
    %v330 = vunpack.c.h.b16 %v285
    %v331 = vunpack.c.l.b16 %v286
    %v332 = vunpack.c.h.b16 %v286
    %v333 = vunpack.c.l.b16 %v287
    %v334 = vunpack.c.h.b16 %v287
    %v335 = vunpack.c.l.b16 %v288
    %v336 = vunpack.c.h.b16 %v288
    %v337 = vpack.c.b16 %v307, %v305
    %v338 = vpack.c.b16 %v308, %v306
    %v339 = vpack.c.b16 %v311, %v309
    %v340 = vpack.c.b16 %v312, %v310
    %v341 = vpack.c.b16 %v315, %v313
    %v342 = vpack.c.b16 %v316, %v314
    %v343 = vpack.c.b16 %v319, %v317
    %v344 = vpack.c.b16 %v320, %v318
    %v345 = vpack.c.b16 %v323, %v321
    %v346 = vpack.c.b16 %v324, %v322
    %v347 = vpack.c.b16 %v327, %v325
    %v348 = vpack.c.b16 %v328, %v326
    %v349 = vpack.c.b16 %v331, %v329
    %v350 = vpack.c.b16 %v332, %v330
    %v351 = vpack.c.b16 %v335, %v333
    %v352 = vpack.c.b16 %v336, %v334
    %369 = vmatprep.subr.bf16.mxu0 %v352
    %370 = vmatpush1.bf16.msra.mxu0 %v351
    %371 = vmatprep.subr.bf16.mxu0 %v350
    %372 = vmatpush1.bf16.msra.mxu0 %v349
    %373 = vmatprep.subr.bf16.mxu0 %v348
    %374 = vmatpush1.bf16.msra.mxu0 %v347
    %375 = vmatprep.subr.bf16.mxu0 %v346
    %376 = vmatpush1.bf16.msra.mxu0 %v345
    %377 = vmatprep.subr.bf16.mxu0 %v344
    %378 = vmatpush1.bf16.msra.mxu0 %v343
    %379 = vmatprep.subr.bf16.mxu0 %v342
    %380 = vmatpush1.bf16.msra.mxu0 %v341
    %381 = vmatprep.subr.bf16.mxu0 %v340
    %382 = vmatpush1.bf16.msra.mxu0 %v339
    %383 = vmatprep.subr.bf16.mxu0 %v338
    %384 = vmatpush1.bf16.msra.mxu0 %v337
    %385 = vmatprep.subr.bf16.mxu0 0
    %386 = vmatpush2.bf16.msra.mxu0 0
    %387 = vmatprep.subr.bf16.mxu0 0
    %388 = vmatpush2.bf16.msra.mxu0 0
    %389 = vmatprep.subr.bf16.mxu0 0
    %390 = vmatpush2.bf16.msra.mxu0 0
    %391 = vmatprep.subr.bf16.mxu0 0
    %392 = vmatpush2.bf16.msra.mxu0 0
    %393 = vmatprep.subr.bf16.mxu0 0
    %394 = vmatpush2.bf16.msra.mxu0 0
    %395 = vmatprep.subr.bf16.mxu0 0
    %396 = vmatpush2.bf16.msra.mxu0 0
    %397 = vmatprep.subr.bf16.mxu0 0
    %398 = vmatpush2.bf16.msra.mxu0 0
    %399 = vmatprep.subr.bf16.mxu0 0
    %400 = vmatpush2.bf16.msra.mxu0 0
    %401 = vmatprep.mubr.bf16.mxu0 0
    %402 = vmatmul.mubr.bf16.gmra.mxu0 %v272
    %v403 = vpop.f32.mrf.mxu0
    %v404 = vadd.f32 0.0, %v403
    %v405 = vpop.f32.mrf.mxu0
    %v406 = vadd.f32 0.0, %v405
    %v407 = vpop.f32.mrf.mxu0
    %v408 = vpop.f32.mrf.mxu0
    %409 = vdwg.mxu0
    %v410 = vunpack.c.l.bf16 %v95
    %v411 = vunpack.c.h.bf16 %v95
    %v412 = vadd.f32 %v404, %v404
    %v413 = vadd.f32 %v406, %v406
    %v414 = vxor.u32 %v412, 2147483648
    %v415 = vxor.u32 %v413, 2147483648
    %v416 = vmul.f32 %v414, 1.442695
    %v417 = vpow.pop %v416
    %v418 = vmul.f32 %v415, 1.442695
    %v419 = vpow.pop %v418
    %v420 = vadd.f32 %v417, 1.0
    %v421 = vadd.f32 %v419, 1.0
    %v422 = vrcp.pop %v420
    %v423 = vmul.f32 1.0, %v422
    %v424 = vrcp.pop %v421
    %v425 = vmul.f32 1.0, %v424
    %v426 = vmul.f32 %v410, %v423
    %v427 = vmul.f32 %v411, %v425
    %v428 = vadd.f32 %v426, %v427
    %429 = vadd.xlane.f32.xlu0 %v428
    %v430 = vpop.xlane.xlu0 %429
    %v431 = vrcp.pop 256.0
    %v432 = vmul.f32 %v430, %v431
    %v433 = vmax.f32 %v426, %v427
    %434 = vmax.xlane.f32.xlu0 %v433
    %v435 = vpop.xlane.xlu0 %434
    %s436 = sld [smem:[#allocation11]]
    %v437 = vstv %s436
    %v438 = vmul.f32 %v432, %v437
    %s439 = sld [smem:[#allocation11 + $0x1]]
    %v440 = vstv %s439
    %v441 = vmul.f32 %v435, %v440
    %v442 = vadd.f32 %v438, %v441
    %v443 = vxor.u32 %v442, 2147483648
    %v444 = vmul.f32 %v443, 1.442695
    %v445 = vpow.pop %v444
    %v446 = vadd.f32 %v445, 1.0
    %v447 = vrcp.pop %v446
    %v448 = vmul.f32 1.0, %v447
    %v449 = vmul.f32 %v426, %v448
    %v450 = vmul.f32 %v427, %v448
    %v451 = vld [vmem:[#allocation9] sm:$0x1]
    %v452 = vld [vmem:[#allocation9 + $0x1] sm:$0x1]
    %v453 = vld [vmem:[#allocation9 + $0x2] sm:$0x1]
    %v454 = vpack.c.bf16 %v449, %v449
    %v455 = vpack.c.bf16 %v450, %v450
    %v456 = vld [vmem:[%s3] sm:$0xf]
    %v457 = vld [vmem:[%s3 + $0x4] sm:$0xf]
    %v458 = vld [vmem:[%s3 + $0x8] sm:$0xf]
    %v459 = vld [vmem:[%s3 + $0xc] sm:$0xf]
    %v460 = vld [vmem:[%s3 + $0x10] sm:$0xf]
    %v461 = vld [vmem:[%s3 + $0x14] sm:$0xf]
    %v462 = vld [vmem:[%s3 + $0x18] sm:$0xf]
    %v463 = vld [vmem:[%s3 + $0x1c] sm:$0xf]
    %v464 = vld [vmem:[%s3 + $0x20] sm:$0xf]
    %v465 = vld [vmem:[%s3 + $0x24] sm:$0xf]
    %v466 = vld [vmem:[%s3 + $0x28] sm:$0xf]
    %v467 = vld [vmem:[%s3 + $0x2c] sm:$0xf]
    %v468 = vld [vmem:[%s3 + $0x30] sm:$0xf]
    %v469 = vld [vmem:[%s3 + $0x34] sm:$0xf]
    %v470 = vld [vmem:[%s3 + $0x38] sm:$0xf]
    %v471 = vld [vmem:[%s3 + $0x3c] sm:$0xf]
    %v472 = vld [vmem:[%s3 + $0x40] sm:$0xf]
    %v473 = vld [vmem:[%s3 + $0x44] sm:$0xf]
    %v474 = vld [vmem:[%s3 + $0x48] sm:$0xf]
    %v475 = vld [vmem:[%s3 + $0x4c] sm:$0xf]
    %v476 = vld [vmem:[%s3 + $0x50] sm:$0xf]
    %v477 = vld [vmem:[%s3 + $0x54] sm:$0xf]
    %v478 = vld [vmem:[%s3 + $0x58] sm:$0xf]
    %v479 = vld [vmem:[%s3 + $0x5c] sm:$0xf]
    %v480 = vld [vmem:[%s3 + $0x60] sm:$0xf]
    %v481 = vld [vmem:[%s3 + $0x64] sm:$0xf]
    %v482 = vld [vmem:[%s3 + $0x68] sm:$0xf]
    %v483 = vld [vmem:[%s3 + $0x6c] sm:$0xf]
    %v484 = vld [vmem:[%s3 + $0x70] sm:$0xf]
    %v485 = vld [vmem:[%s3 + $0x74] sm:$0xf]
    %v486 = vld [vmem:[%s3 + $0x78] sm:$0xf]
    %v487 = vld [vmem:[%s3 + $0x7c] sm:$0xf]
    %v488 = vlaneseq
    %v489 = vshrl.u32 %v488, 7
    %v490 = vsub.s32 0, %v489
    %v491 = vrot.slane %v451, %v490
    %v524 = vunpack.c.l.b16 %v456
    %v525 = vunpack.c.l.b16 %v457
    %v526 = vunpack.c.l.b16 %v458
    %v527 = vunpack.c.l.b16 %v459
    %v528 = vunpack.c.l.b16 %v460
    %v529 = vunpack.c.l.b16 %v461
    %v530 = vunpack.c.l.b16 %v462
    %v531 = vunpack.c.l.b16 %v463
    %v532 = vunpack.c.l.b16 %v464
    %v533 = vunpack.c.l.b16 %v465
    %v534 = vunpack.c.l.b16 %v466
    %v535 = vunpack.c.l.b16 %v467
    %v536 = vunpack.c.l.b16 %v468
    %v537 = vunpack.c.l.b16 %v469
    %v538 = vunpack.c.l.b16 %v470
    %v539 = vunpack.c.l.b16 %v471
    %v540 = vunpack.c.l.b16 %v472
    %v541 = vunpack.c.l.b16 %v473
    %v542 = vunpack.c.l.b16 %v474
    %v543 = vunpack.c.l.b16 %v475
    %v544 = vunpack.c.l.b16 %v476
    %v545 = vunpack.c.l.b16 %v477
    %v546 = vunpack.c.l.b16 %v478
    %v547 = vunpack.c.l.b16 %v479
    %v548 = vunpack.c.l.b16 %v480
    %v549 = vunpack.c.l.b16 %v481
    %v550 = vunpack.c.l.b16 %v482
    %v551 = vunpack.c.l.b16 %v483
    %v552 = vunpack.c.l.b16 %v484
    %v553 = vunpack.c.l.b16 %v485
    %v554 = vunpack.c.l.b16 %v486
    %v555 = vunpack.c.l.b16 %v487
    %v556 = vpack.c.b16 %v525, %v524
    %v557 = vpack.c.b16 %v527, %v526
    %v558 = vpack.c.b16 %v529, %v528
    %v559 = vpack.c.b16 %v531, %v530
    %v560 = vpack.c.b16 %v533, %v532
    %v561 = vpack.c.b16 %v535, %v534
    %v562 = vpack.c.b16 %v537, %v536
    %v563 = vpack.c.b16 %v539, %v538
    %v564 = vpack.c.b16 %v541, %v540
    %v565 = vpack.c.b16 %v543, %v542
    %v566 = vpack.c.b16 %v545, %v544
    %v567 = vpack.c.b16 %v547, %v546
    %v568 = vpack.c.b16 %v549, %v548
    %v569 = vpack.c.b16 %v551, %v550
    %v570 = vpack.c.b16 %v553, %v552
    %v571 = vpack.c.b16 %v555, %v554
    %588 = vmatprep.subr.bf16.mxu0 0
    %589 = vmatpush1.bf16.msra.mxu0 %v563
    %590 = vmatprep.subr.bf16.mxu0 0
    %591 = vmatpush1.bf16.msra.mxu0 %v562
    %592 = vmatprep.subr.bf16.mxu0 0
    %593 = vmatpush1.bf16.msra.mxu0 %v561
    %594 = vmatprep.subr.bf16.mxu0 0
    %595 = vmatpush1.bf16.msra.mxu0 %v560
    %596 = vmatprep.subr.bf16.mxu0 0
    %597 = vmatpush1.bf16.msra.mxu0 %v559
    %598 = vmatprep.subr.bf16.mxu0 0
    %599 = vmatpush1.bf16.msra.mxu0 %v558
    %600 = vmatprep.subr.bf16.mxu0 0
    %601 = vmatpush1.bf16.msra.mxu0 %v557
    %602 = vmatprep.subr.bf16.mxu0 0
    %603 = vmatpush1.bf16.msra.mxu0 %v556
    %604 = vmatprep.subr.bf16.mxu0 0
    %605 = vmatpush2.bf16.msra.mxu0 %v571
    %606 = vmatprep.subr.bf16.mxu0 0
    %607 = vmatpush2.bf16.msra.mxu0 %v570
    %608 = vmatprep.subr.bf16.mxu0 0
    %609 = vmatpush2.bf16.msra.mxu0 %v569
    %610 = vmatprep.subr.bf16.mxu0 0
    %611 = vmatpush2.bf16.msra.mxu0 %v568
    %612 = vmatprep.subr.bf16.mxu0 0
    %613 = vmatpush2.bf16.msra.mxu0 %v567
    %614 = vmatprep.subr.bf16.mxu0 0
    %615 = vmatpush2.bf16.msra.mxu0 %v566
    %616 = vmatprep.subr.bf16.mxu0 0
    %617 = vmatpush2.bf16.msra.mxu0 %v565
    %618 = vmatprep.subr.bf16.mxu0 0
    %619 = vmatpush2.bf16.msra.mxu0 %v564
    %620 = vmatprep.mubr.bf16.mxu0 %v455
    %621 = vmatmul.mubr.bf16.gmra.mxu0 %v454
    %v622 = vpop.f32.mrf.mxu0
    %v623 = vadd.f32 %v491, %v622
    %v624 = vpop.f32.mrf.mxu0
    %v625 = vpop.f32.mrf.mxu0
    %v626 = vpop.f32.mrf.mxu0
    %627 = vdwg.mxu0
    %v628 = vmax.f32 %v623, 0.0
    %v629 = vpack.c.bf16 %v628, %v628
    %v630 = vld [vmem:[%s4] sm:$0xf]
    %v631 = vld [vmem:[%s4 + $0x4] sm:$0xf]
    %v632 = vld [vmem:[%s4 + $0x8] sm:$0xf]
    %v633 = vld [vmem:[%s4 + $0xc] sm:$0xf]
    %v634 = vld [vmem:[%s4 + $0x10] sm:$0xf]
    %v635 = vld [vmem:[%s4 + $0x14] sm:$0xf]
    %v636 = vld [vmem:[%s4 + $0x18] sm:$0xf]
    %v637 = vld [vmem:[%s4 + $0x1c] sm:$0xf]
    %v638 = vld [vmem:[%s4 + $0x20] sm:$0xf]
    %v639 = vld [vmem:[%s4 + $0x24] sm:$0xf]
    %v640 = vld [vmem:[%s4 + $0x28] sm:$0xf]
    %v641 = vld [vmem:[%s4 + $0x2c] sm:$0xf]
    %v642 = vld [vmem:[%s4 + $0x30] sm:$0xf]
    %v643 = vld [vmem:[%s4 + $0x34] sm:$0xf]
    %v644 = vld [vmem:[%s4 + $0x38] sm:$0xf]
    %v645 = vld [vmem:[%s4 + $0x3c] sm:$0xf]
    %v646 = vlaneseq
    %v647 = vshrl.u32 %v646, 7
    %v648 = vsub.s32 0, %v647
    %v649 = vrot.slane %v452, %v648
    %v666 = vunpack.c.l.b16 %v630
    %v667 = vunpack.c.l.b16 %v631
    %v668 = vunpack.c.l.b16 %v632
    %v669 = vunpack.c.l.b16 %v633
    %v670 = vunpack.c.l.b16 %v634
    %v671 = vunpack.c.l.b16 %v635
    %v672 = vunpack.c.l.b16 %v636
    %v673 = vunpack.c.l.b16 %v637
    %v674 = vunpack.c.l.b16 %v638
    %v675 = vunpack.c.l.b16 %v639
    %v676 = vunpack.c.l.b16 %v640
    %v677 = vunpack.c.l.b16 %v641
    %v678 = vunpack.c.l.b16 %v642
    %v679 = vunpack.c.l.b16 %v643
    %v680 = vunpack.c.l.b16 %v644
    %v681 = vunpack.c.l.b16 %v645
    %v682 = vpack.c.b16 %v667, %v666
    %v683 = vpack.c.b16 %v669, %v668
    %v684 = vpack.c.b16 %v671, %v670
    %v685 = vpack.c.b16 %v673, %v672
    %v686 = vpack.c.b16 %v675, %v674
    %v687 = vpack.c.b16 %v677, %v676
    %v688 = vpack.c.b16 %v679, %v678
    %v689 = vpack.c.b16 %v681, %v680
    %698 = vmatprep.subr.bf16.mxu0 0
    %699 = vmatpush1.bf16.msra.mxu0 %v689
    %700 = vmatprep.subr.bf16.mxu0 0
    %701 = vmatpush1.bf16.msra.mxu0 %v688
    %702 = vmatprep.subr.bf16.mxu0 0
    %703 = vmatpush1.bf16.msra.mxu0 %v687
    %704 = vmatprep.subr.bf16.mxu0 0
    %705 = vmatpush1.bf16.msra.mxu0 %v686
    %706 = vmatprep.subr.bf16.mxu0 0
    %707 = vmatpush1.bf16.msra.mxu0 %v685
    %708 = vmatprep.subr.bf16.mxu0 0
    %709 = vmatpush1.bf16.msra.mxu0 %v684
    %710 = vmatprep.subr.bf16.mxu0 0
    %711 = vmatpush1.bf16.msra.mxu0 %v683
    %712 = vmatprep.subr.bf16.mxu0 0
    %713 = vmatpush1.bf16.msra.mxu0 %v682
    %714 = vmatprep.subr.bf16.mxu0 0
    %715 = vmatpush2.bf16.msra.mxu0 0
    %716 = vmatprep.subr.bf16.mxu0 0
    %717 = vmatpush2.bf16.msra.mxu0 0
    %718 = vmatprep.subr.bf16.mxu0 0
    %719 = vmatpush2.bf16.msra.mxu0 0
    %720 = vmatprep.subr.bf16.mxu0 0
    %721 = vmatpush2.bf16.msra.mxu0 0
    %722 = vmatprep.subr.bf16.mxu0 0
    %723 = vmatpush2.bf16.msra.mxu0 0
    %724 = vmatprep.subr.bf16.mxu0 0
    %725 = vmatpush2.bf16.msra.mxu0 0
    %726 = vmatprep.subr.bf16.mxu0 0
    %727 = vmatpush2.bf16.msra.mxu0 0
    %728 = vmatprep.subr.bf16.mxu0 0
    %729 = vmatpush2.bf16.msra.mxu0 0
    %730 = vmatprep.mubr.bf16.mxu0 0
    %731 = vmatmul.mubr.bf16.gmra.mxu0 %v629
    %v732 = vpop.f32.mrf.mxu0
    %v733 = vadd.f32 %v649, %v732
    %v734 = vpop.f32.mrf.mxu0
    %v735 = vpop.f32.mrf.mxu0
    %v736 = vpop.f32.mrf.mxu0
    %737 = vdwg.mxu0
    %v738 = vmax.f32 %v733, 0.0
    %v739 = vpack.c.bf16 %v738, %v738
    %v740 = vld [vmem:[#allocation8] sm:$0xf]
    %v741 = vld [vmem:[#allocation8 + $0x4] sm:$0xf]
    %v742 = vld [vmem:[#allocation8 + $0x8] sm:$0xf]
    %v743 = vld [vmem:[#allocation8 + $0xc] sm:$0xf]
    %v744 = vld [vmem:[#allocation8 + $0x10] sm:$0xf]
    %v745 = vld [vmem:[#allocation8 + $0x14] sm:$0xf]
    %v746 = vld [vmem:[#allocation8 + $0x18] sm:$0xf]
    %v747 = vld [vmem:[#allocation8 + $0x1c] sm:$0xf]
    %v748 = vlaneseq
    %v749 = vshrl.u32 %v748, 7
    %v750 = vsub.s32 0, %v749
    %v751 = vrot.slane %v453, %v750
    %v760 = vunpack.c.l.b16 %v740
    %v761 = vunpack.c.l.b16 %v741
    %v762 = vunpack.c.l.b16 %v742
    %v763 = vunpack.c.l.b16 %v743
    %v764 = vunpack.c.l.b16 %v744
    %v765 = vunpack.c.l.b16 %v745
    %v766 = vunpack.c.l.b16 %v746
    %v767 = vunpack.c.l.b16 %v747
    %v768 = vpack.c.b16 %v761, %v760
    %v769 = vpack.c.b16 %v763, %v762
    %v770 = vpack.c.b16 %v765, %v764
    %v771 = vpack.c.b16 %v767, %v766
    %vm776 = vcmask 523264
    %v778 = vsel %vm776, %v739, 0
    %780 = vmatprep.subr.bf16.mxu0 0
    %781 = vmatpush1.bf16.msra.mxu0 0
    %782 = vmatprep.subr.bf16.mxu0 0
    %783 = vmatpush1.bf16.msra.mxu0 0
    %784 = vmatprep.subr.bf16.mxu0 0
    %785 = vmatpush1.bf16.msra.mxu0 0
    %786 = vmatprep.subr.bf16.mxu0 0
    %787 = vmatpush1.bf16.msra.mxu0 0
    %788 = vmatprep.subr.bf16.mxu0 0
    %789 = vmatpush1.bf16.msra.mxu0 %v771
    %790 = vmatprep.subr.bf16.mxu0 0
    %791 = vmatpush1.bf16.msra.mxu0 %v770
    %792 = vmatprep.subr.bf16.mxu0 0
    %793 = vmatpush1.bf16.msra.mxu0 %v769
    %794 = vmatprep.subr.bf16.mxu0 0
    %795 = vmatpush1.bf16.msra.mxu0 %v768
    %796 = vmatprep.subr.bf16.mxu0 0
    %797 = vmatpush2.bf16.msra.mxu0 0
    %798 = vmatprep.subr.bf16.mxu0 0
    %799 = vmatpush2.bf16.msra.mxu0 0
    %800 = vmatprep.subr.bf16.mxu0 0
    %801 = vmatpush2.bf16.msra.mxu0 0
    %802 = vmatprep.subr.bf16.mxu0 0
    %803 = vmatpush2.bf16.msra.mxu0 0
    %804 = vmatprep.subr.bf16.mxu0 0
    %805 = vmatpush2.bf16.msra.mxu0 0
    %806 = vmatprep.subr.bf16.mxu0 0
    %807 = vmatpush2.bf16.msra.mxu0 0
    %808 = vmatprep.subr.bf16.mxu0 0
    %809 = vmatpush2.bf16.msra.mxu0 0
    %810 = vmatprep.subr.bf16.mxu0 0
    %811 = vmatpush2.bf16.msra.mxu0 0
    %812 = vmatprep.mubr.bf16.mxu0 0
    %813 = vmatmul.mubr.bf16.gmra.mxu0 %v778
    %v814 = vpop.f32.mrf.mxu0
    %v815 = vadd.f32 %v751, %v814
    %v816 = vpop.f32.mrf.mxu0
    %v817 = vpop.f32.mrf.mxu0
    %v818 = vpop.f32.mrf.mxu0
    %819 = vdwg.mxu0
    %820 = vst [vmem:[#allocation12] sm:$0xff] %v815
    // Predicated region
    $region54: #{_forward_padded.1} parent=1 // pred_check
      _
    $region55: #{_forward_padded.1} parent=1 // pred_check_branch
      %822 = sbr.rel (0) target = $region57
    $region56: #{_forward_padded.1} parent=1 // pred_region
      %s824 = ssub.s32 128, 128
      %825 = vsyncadd [#allocation4], %s824
      %s827 = sshll.u32 [#allocation12], 4
      %s828 = int_to_ptr.vmem [resolvable:$true] %s827
      %830 = dma.vmem_to_hbm [thread:$0]  %s828, 128, %s8, [#allocation4]
    $region57: #{_forward_padded.1} parent=1 // pred_fallthru
      _
    // Predicated region
    $region58: #{_forward_padded.1} parent=1 // pred_check
      _
    $region59: #{_forward_padded.1} parent=1 // pred_check_branch
      %832 = sbr.rel (0) target = $region61
    $region60: #{_forward_padded.1} parent=1 // pred_region
      %833 = dma.done [#allocation4], 128
    $region61: #{_forward_padded.1} parent=1 // pred_fallthru
      _
    %834 = vsyncpa [#allocation3], 1
    %835 = vsyncpa [#allocation7], 1
    %836 = vsyncpa [#allocation10], 1
    %837 = vsyncpa [#allocation4], 1
    %838 = vsyncpa [#allocation5], 1

</llo_original>
